<compile_context>
chip_gen: v6e
topology: v6e:2x2x1
jax: 0.10.0
libtpu: 0.0.40
codegen_flags: <defaults>
</compile_context>

<pallas_src>
import jax
import jax.numpy as jnp
from jax.experimental import pallas as pl
from jax.experimental.pallas import tpu as pltpu

LANES = 128  # vreg lane width; one packed row = 128 samples


def _linear_relu_kernel(x_ref, w_ref, b_ref, o_ref):
    # x_ref: (TR, 128*D_in) packed samples           (VMEM, pipelined)
    # w_ref: (128*D_in, 128) block-diagonal weight    (VMEM, resident)
    # b_ref: (1, 1) scalar bias                       (SMEM)
    # o_ref: (TR, 128) lane-dense outputs             (VMEM, pipelined)
    y = jnp.dot(x_ref[...], w_ref[...], preferred_element_type=jnp.float32)
    b = b_ref[0, 0]
    o_ref[...] = jnp.maximum(y + b, 0.0).astype(o_ref.dtype)


def mlp_forward(x, weight, bias, *, rows_per_step=512):
    """x: (B, 12) f32; weight: (1, 12) f32; bias: (1,) f32 -> (B, 1) f32."""
    B, D_in = x.shape
    D_out = weight.shape[0]
    assert D_out == 1 and weight.shape == (D_out, D_in)

    # ---- wrapper-side (free / cheap) layout plumbing -------------------
    # Pad batch to a multiple of 128 so each packed row holds 128 samples.
    B_pad = pl.cdiv(B, LANES) * LANES
    x_p = x if B_pad == B else jnp.pad(x, ((0, B_pad - B), (0, 0)))
    R = B_pad // LANES

    # Free, contiguous reshape: row r, cols [k*D_in : (k+1)*D_in] = sample r*128+k.
    x_packed = x_p.reshape(R, LANES * D_in).astype(jnp.float32)

    # Block-diagonal weight: W_big[k*D_in + i, k] = w[i]  (1536 x 128, 768 KB).
    w = weight.reshape(D_in).astype(jnp.float32)
    eye = jnp.eye(LANES, dtype=jnp.float32)
    w_big = (eye[:, None, :] * w[None, :, None]).reshape(LANES * D_in, LANES)

    b2d = bias.reshape(1, 1).astype(jnp.float32)  # SMEM scalar

    # ---- tiling --------------------------------------------------------
    # 512 packed rows/step -> 3 MB input + 256 KB output per buffer.
    # Double-buffered in/out + resident 768 KB weight ~= 7.3 MB VMEM:
    # fits v5e's 16 MiB scoped default, v6e/v7x's 32 MiB, with headroom.
    TR = min(R, rows_per_step)
    grid = (pl.cdiv(R, TR),)

    cost = pl.CostEstimate(
        flops=2 * R * (LANES * D_in) * LANES,        # MXU flops actually issued
        transcendentals=0,
        bytes_accessed=(x_packed.size + R * LANES + w_big.size + 1) * 4,
    )

    out_packed = pl.pallas_call(
        _linear_relu_kernel,
        out_shape=jax.ShapeDtypeStruct((R, LANES), jnp.float32),
        grid=grid,
        in_specs=[
            # Lane-dense, batch-tiled, pipelined input (the only HBM traffic
            # that matters).
            pl.BlockSpec((TR, LANES * D_in), lambda i: (i, 0)),
            # Block-diagonal weight stays VMEM-resident across all grid steps.
            pl.BlockSpec((LANES * D_in, LANES), lambda i: (0, 0)),
            # Scalar bias in SMEM (scalar read path, no VMEM buffer pair).
            pl.BlockSpec(memory_space=pltpu.MemorySpace.SMEM),
        ],
        # Lane-dense output slab: full 128-lane unmasked vst rows.
        out_specs=pl.BlockSpec((TR, LANES), lambda i: (i, 0)),
        compiler_params=pltpu.CompilerParams(
            dimension_semantics=("parallel",),  # megacore sharding on v7x
        ),
        cost_estimate=cost,
    )(x_packed, w_big, b2d)

    # Free reshape back to (B_pad, 1); drop the padded tail rows.
    return out_packed.reshape(B_pad, 1)[:B]


if __name__ == "__main__":
    key = jax.random.PRNGKey(0)
    kx, kw, kb, kx2 = jax.random.split(key, 4)

    D_in, D_out = 12, 1
    # Deterministic parameter init (mimics nn.Linear uniform(-1/sqrt(fan_in), +)).
    bound = 1.0 / (D_in ** 0.5)
    weight = jax.random.uniform(kw, (D_out, D_in), jnp.float32, -bound, bound)
    bias = jax.random.uniform(kb, (D_out,), jnp.float32, -bound, bound)

    # Small batch (needs padding to 128, single grid step).
    B_small = 8
    x_small = jax.random.normal(kx, (B_small, D_in), dtype=jnp.float32)
    out_small = jax.block_until_ready(mlp_forward(x_small, weight, bias))
    ref_small = jnp.maximum(x_small @ weight.T + bias, 0.0)
    assert out_small.shape == (B_small, D_out)
    assert jnp.allclose(out_small, ref_small, atol=1e-5, rtol=1e-5)

    # Non-multiple-of-128 batch with a small rows_per_step to exercise the
    # multi-step pipelined path (grid > 1) and the padded-tail handling.
    B_big = 1000
    x_big = jax.random.normal(kx2, (B_big, D_in), dtype=jnp.float32)
    out_big = jax.block_until_ready(
        mlp_forward(x_big, weight, bias, rows_per_step=4)
    )
    ref_big = jnp.maximum(x_big @ weight.T + bias, 0.0)
    assert out_big.shape == (B_big, D_out)
    assert jnp.allclose(out_big, ref_big, atol=1e-5, rtol=1e-5)

    print("KERNEL_OK")
</pallas_src>

<mosaic_0001>
module attributes {stable_mosaic.version = 11 : i64} {
  func.func @_linear_relu_kernel(%arg0: i32, %arg1: memref<1x1536xf32, #tpu.memory_space<vmem>>, %arg2: memref<1536x128xf32, #tpu.memory_space<vmem>>, %arg3: memref<1x1xf32, #tpu.memory_space<smem>>, %arg4: memref<1x128xf32, #tpu.memory_space<vmem>>) attributes {dimension_semantics = [#tpu.dimension_semantics<parallel>], iteration_bounds = array<i64: 1>, scalar_prefetch = 0 : i64, scratch_operands = 0 : i64, tpu.core_type = #tpu.core_type<tc>, window_params = [{transform_indices = @transform_0, window_bounds = array<i64: 1, 1536>}, {pipeline_mode = #tpu.pipeline_mode<synchronous>, transform_indices = @transform_1, window_bounds = array<i64: 1536, 128>}, {transform_indices = @transform_2, window_bounds = array<i64: 1, 1>}, {transform_indices = @transform_3, window_bounds = array<i64: 1, 128>}]} {
    %c0 = arith.constant 0 : index
    %c0_0 = arith.constant 0 : index
    %0 = vector.load %arg1[%c0, %c0_0] : memref<1x1536xf32, #tpu.memory_space<vmem>>, vector<1x1536xf32>
    %c0_1 = arith.constant 0 : index
    %c0_2 = arith.constant 0 : index
    %1 = vector.load %arg2[%c0_1, %c0_2] : memref<1536x128xf32, #tpu.memory_space<vmem>>, vector<1536x128xf32>
    %cst = arith.constant dense<0.000000e+00> : vector<1x128xf32>
    %2 = tpu.matmul %0, %1, %cst {dimension_numbers = #tpu.dot_dimension_numbers<[1], [0], [0], [1], [0, 0, 1, 1], [], []>} : vector<1x1536xf32>, vector<1536x128xf32>, vector<1x128xf32> -> vector<1x128xf32>
    %c0_3 = arith.constant 0 : index
    %c0_4 = arith.constant 0 : index
    %3 = memref.load %arg3[%c0_3, %c0_4] : memref<1x1xf32, #tpu.memory_space<smem>>
    %4 = vector.broadcast %3 : f32 to vector<1x128xf32>
    %5 = arith.addf %2, %4 : vector<1x128xf32>
    %cst_5 = arith.constant 0.000000e+00 : f32
    %6 = vector.broadcast %cst_5 : f32 to vector<1x128xf32>
    %7 = arith.maximumf %5, %6 : vector<1x128xf32>
    %c0_6 = arith.constant 0 : index
    %c0_7 = arith.constant 0 : index
    %8 = vector.load %arg4[%c0_6, %c0_7] : memref<1x128xf32, #tpu.memory_space<vmem>>, vector<1x128xf32>
    tpu.vector_store %arg4[%c0_6, %c0_7], %7 {strides = array<i32>} : memref<1x128xf32, #tpu.memory_space<vmem>>, vector<1x128xf32>,
    return
  }
  func.func @transform_0(%arg0: i32) -> (i32, i32) {
    %c0_i32 = arith.constant 0 : i32
    %c0_i32_0 = arith.constant 0 : i32
    return %arg0, %c0_i32 : i32, i32
  }
  func.func @transform_1(%arg0: i32) -> (i32, i32) {
    %c0_i32 = arith.constant 0 : i32
    %c0_i32_0 = arith.constant 0 : i32
    %c0_i32_1 = arith.constant 0 : i32
    return %c0_i32, %c0_i32_0 : i32, i32
  }
  func.func @transform_2(%arg0: i32) -> (i32, i32) {
    %c0_i32 = arith.constant 0 : i32
    %c0_i32_0 = arith.constant 0 : i32
    %c0_i32_1 = arith.constant 0 : i32
    return %c0_i32, %c0_i32_0 : i32, i32
  }
  func.func @transform_3(%arg0: i32) -> (i32, i32) {
    %c0_i32 = arith.constant 0 : i32
    %c0_i32_0 = arith.constant 0 : i32
    return %arg0, %c0_i32 : i32, i32
  }
}

</mosaic_0001>

<llo_original>
// kernel: tpu_custom_call.1
$region0: #{tpu_custom_call.1}
  #allocation0 [shape = 'u32[]', space=smem, size = 0x4, offset = 0x4, fixed_abs, tag = 'smem constant byte address 0x4 - core index']
  #allocation1 [shape = 'u32[144,128]{1,0:T(1,128)}', space=vmem, size = 0x12000, scoped, tag = 'internal scratch']
  #allocation2 [shape = 'f32[1,1]{1,0:T(1,128)S(6)}', space=smem, size = 0x200, scoped, tag = 'scoped memory for tpu_custom_call.1']
  %s0 = inlined_call_operand.hbm [shape: f32[1,1536], index: 0, kind: input, shape index: {}]
  %s1 = inlined_call_operand.hbm [shape: f32[1536,128], index: 1, kind: input, shape index: {}]
  %s2 = inlined_call_operand.<no memory space> [shape: f32[1,1], index: 2, kind: input, shape index: {}]
  %s3 = inlined_call_operand.hbm [shape: f32[1,128], index: 3, kind: output, shape index: {}]
  %s4 = sld [smem:[#allocation0]]
  $region30: #{tpu_custom_call.1} parent=0
    _
  %s6 = ssub.s32 1, %s4
  %s7 = scalar_select 0, %s6, %s4
  %8 = sst [smem:[#allocation2]] %s2
  $region1: #{tpu_custom_call.1} parent=0
    #allocation3 [shape = 'u8[6144]{0}', space=vmem, size = 0x1800, scoped, tag = 'input window, operand 0, single buffered']
    #allocation4 [shape = 's32[1]{0}', space=sflag, size = 0x4, scoped, tag = 'scoped memory for tpu_custom_call.1']
    #allocation5 [shape = 's32[1]{0}', space=sflag, size = 0x4, scoped, tag = 'scoped memory for tpu_custom_call.1']
    #allocation6 [shape = 'u8[786432]{0}', space=vmem, size = 0xc0000, scoped, tag = 'input window, operand 1, single buffered']
    #allocation7 [shape = 's32[1]{0}', space=sflag, size = 0x4, scoped, tag = 'scoped memory for tpu_custom_call.1']
    #allocation8 [shape = 'u8[512]{0}', space=vmem, size = 0x400, scoped, tag = 'output window, operand 0, single buffered']
    %9 = vsyncpa [#allocation4], 0
    %10 = vsyncpa [#allocation7], 0
    %11 = vsyncpa [#allocation5], 0
    // Predicated region
    $region2: #{tpu_custom_call.1} parent=1 // pred_check
      _
    $region3: #{tpu_custom_call.1} parent=1 // pred_check_branch
      %13 = sbr.rel (0) target = $region5
    $region4: #{tpu_custom_call.1} parent=1 // pred_region
      %s15 = ssub.s32 192, 192
      %16 = vsyncadd [#allocation4], %s15
      %s18 = sshll.u32 [#allocation3], 4
      %s19 = int_to_ptr.vmem [resolvable:$true] %s18
      %21 = dma.hbm_to_vmem [thread:$0]  %s0, 192, %s19, [#allocation4]
    $region5: #{tpu_custom_call.1} parent=1 // pred_fallthru
      _
    // Predicated region
    $region6: #{tpu_custom_call.1} parent=1 // pred_check
      _
    $region7: #{tpu_custom_call.1} parent=1 // pred_check_branch
      %23 = sbr.rel (0) target = $region9
    $region8: #{tpu_custom_call.1} parent=1 // pred_region
      %s25 = ssub.s32 24576, 24576
      %26 = vsyncadd [#allocation7], %s25
      %s27 = sshll.u32 [#allocation6], 4
      %s28 = int_to_ptr.vmem [resolvable:$true] %s27
      %33 = dma.hbm_to_vmem [thread:$0]  %s1, 24576, %s28, [#allocation7], 128, 128, 8
    $region9: #{tpu_custom_call.1} parent=1 // pred_fallthru
      _
    // Predicated region
    $region10: #{tpu_custom_call.1} parent=1 // pred_check
      _
    $region11: #{tpu_custom_call.1} parent=1 // pred_check_branch
      %35 = sbr.rel (0) target = $region13
    $region12: #{tpu_custom_call.1} parent=1 // pred_region
      _
    $region13: #{tpu_custom_call.1} parent=1 // pred_fallthru
      _
    // Predicated region
    $region14: #{tpu_custom_call.1} parent=1 // pred_check
      _
    $region15: #{tpu_custom_call.1} parent=1 // pred_check_branch
      %37 = sbr.rel (0) target = $region17
    $region16: #{tpu_custom_call.1} parent=1 // pred_region
      %38 = dma.done [#allocation4], 192
    $region17: #{tpu_custom_call.1} parent=1 // pred_fallthru
      _
    // Predicated region
    $region18: #{tpu_custom_call.1} parent=1 // pred_check
      _
    $region19: #{tpu_custom_call.1} parent=1 // pred_check_branch
      %40 = sbr.rel (0) target = $region21
    $region20: #{tpu_custom_call.1} parent=1 // pred_region
      %41 = dma.done [#allocation7], 24576
    $region21: #{tpu_custom_call.1} parent=1 // pred_fallthru
      _
    %v42 = vld [vmem:[#allocation3] sm:$0xff]
    %v43 = vld [vmem:[#allocation3 + $0x8] sm:$0xf]
    %v44 = vld [vmem:[#allocation6] sm:$0xff]
    %v45 = vld [vmem:[#allocation6 + $0x8] sm:$0xff]
    %v46 = vld [vmem:[#allocation6 + $0x10] sm:$0xff]
    %v47 = vld [vmem:[#allocation6 + $0x18] sm:$0xff]
    %v48 = vld [vmem:[#allocation6 + $0x20] sm:$0xff]
    %v49 = vld [vmem:[#allocation6 + $0x28] sm:$0xff]
    %v50 = vld [vmem:[#allocation6 + $0x30] sm:$0xff]
    %v51 = vld [vmem:[#allocation6 + $0x38] sm:$0xff]
    %v52 = vld [vmem:[#allocation6 + $0x40] sm:$0xff]
    %v53 = vld [vmem:[#allocation6 + $0x48] sm:$0xff]
    %v54 = vld [vmem:[#allocation6 + $0x50] sm:$0xff]
    %v55 = vld [vmem:[#allocation6 + $0x58] sm:$0xff]
    %v56 = vld [vmem:[#allocation6 + $0x60] sm:$0xff]
    %v57 = vld [vmem:[#allocation6 + $0x68] sm:$0xff]
    %v58 = vld [vmem:[#allocation6 + $0x70] sm:$0xff]
    %v59 = vld [vmem:[#allocation6 + $0x78] sm:$0xff]
    %v60 = vld [vmem:[#allocation6 + $0x80] sm:$0xff]
    %v61 = vld [vmem:[#allocation6 + $0x88] sm:$0xff]
    %v62 = vld [vmem:[#allocation6 + $0x90] sm:$0xff]
    %v63 = vld [vmem:[#allocation6 + $0x98] sm:$0xff]
    %v64 = vld [vmem:[#allocation6 + $0xa0] sm:$0xff]
    %v65 = vld [vmem:[#allocation6 + $0xa8] sm:$0xff]
    %v66 = vld [vmem:[#allocation6 + $0xb0] sm:$0xff]
    %v67 = vld [vmem:[#allocation6 + $0xb8] sm:$0xff]
    %v68 = vld [vmem:[#allocation6 + $0xc0] sm:$0xff]
    %v69 = vld [vmem:[#allocation6 + $0xc8] sm:$0xff]
    %v70 = vld [vmem:[#allocation6 + $0xd0] sm:$0xff]
    %v71 = vld [vmem:[#allocation6 + $0xd8] sm:$0xff]
    %v72 = vld [vmem:[#allocation6 + $0xe0] sm:$0xff]
    %v73 = vld [vmem:[#allocation6 + $0xe8] sm:$0xff]
    %v74 = vld [vmem:[#allocation6 + $0xf0] sm:$0xff]
    %v75 = vld [vmem:[#allocation6 + $0xf8] sm:$0xff]
    %v76 = vld [vmem:[#allocation6 + $0x100] sm:$0xff]
    %v77 = vld [vmem:[#allocation6 + $0x108] sm:$0xff]
    %v78 = vld [vmem:[#allocation6 + $0x110] sm:$0xff]
    %v79 = vld [vmem:[#allocation6 + $0x118] sm:$0xff]
    %v80 = vld [vmem:[#allocation6 + $0x120] sm:$0xff]
    %v81 = vld [vmem:[#allocation6 + $0x128] sm:$0xff]
    %v82 = vld [vmem:[#allocation6 + $0x130] sm:$0xff]
    %v83 = vld [vmem:[#allocation6 + $0x138] sm:$0xff]
    %v84 = vld [vmem:[#allocation6 + $0x140] sm:$0xff]
    %v85 = vld [vmem:[#allocation6 + $0x148] sm:$0xff]
    %v86 = vld [vmem:[#allocation6 + $0x150] sm:$0xff]
    %v87 = vld [vmem:[#allocation6 + $0x158] sm:$0xff]
    %v88 = vld [vmem:[#allocation6 + $0x160] sm:$0xff]
    %v89 = vld [vmem:[#allocation6 + $0x168] sm:$0xff]
    %v90 = vld [vmem:[#allocation6 + $0x170] sm:$0xff]
    %v91 = vld [vmem:[#allocation6 + $0x178] sm:$0xff]
    %v92 = vld [vmem:[#allocation6 + $0x180] sm:$0xff]
    %v93 = vld [vmem:[#allocation6 + $0x188] sm:$0xff]
    %v94 = vld [vmem:[#allocation6 + $0x190] sm:$0xff]
    %v95 = vld [vmem:[#allocation6 + $0x198] sm:$0xff]
    %v96 = vld [vmem:[#allocation6 + $0x1a0] sm:$0xff]
    %v97 = vld [vmem:[#allocation6 + $0x1a8] sm:$0xff]
    %v98 = vld [vmem:[#allocation6 + $0x1b0] sm:$0xff]
    %v99 = vld [vmem:[#allocation6 + $0x1b8] sm:$0xff]
    %v100 = vld [vmem:[#allocation6 + $0x1c0] sm:$0xff]
    %v101 = vld [vmem:[#allocation6 + $0x1c8] sm:$0xff]
    %v102 = vld [vmem:[#allocation6 + $0x1d0] sm:$0xff]
    %v103 = vld [vmem:[#allocation6 + $0x1d8] sm:$0xff]
    %v104 = vld [vmem:[#allocation6 + $0x1e0] sm:$0xff]
    %v105 = vld [vmem:[#allocation6 + $0x1e8] sm:$0xff]
    %v106 = vld [vmem:[#allocation6 + $0x1f0] sm:$0xff]
    %v107 = vld [vmem:[#allocation6 + $0x1f8] sm:$0xff]
    %v108 = vld [vmem:[#allocation6 + $0x200] sm:$0xff]
    %v109 = vld [vmem:[#allocation6 + $0x208] sm:$0xff]
    %v110 = vld [vmem:[#allocation6 + $0x210] sm:$0xff]
    %v111 = vld [vmem:[#allocation6 + $0x218] sm:$0xff]
    %v112 = vld [vmem:[#allocation6 + $0x220] sm:$0xff]
    %v113 = vld [vmem:[#allocation6 + $0x228] sm:$0xff]
    %v114 = vld [vmem:[#allocation6 + $0x230] sm:$0xff]
    %v115 = vld [vmem:[#allocation6 + $0x238] sm:$0xff]
    %v116 = vld [vmem:[#allocation6 + $0x240] sm:$0xff]
    %v117 = vld [vmem:[#allocation6 + $0x248] sm:$0xff]
    %v118 = vld [vmem:[#allocation6 + $0x250] sm:$0xff]
    %v119 = vld [vmem:[#allocation6 + $0x258] sm:$0xff]
    %v120 = vld [vmem:[#allocation6 + $0x260] sm:$0xff]
    %v121 = vld [vmem:[#allocation6 + $0x268] sm:$0xff]
    %v122 = vld [vmem:[#allocation6 + $0x270] sm:$0xff]
    %v123 = vld [vmem:[#allocation6 + $0x278] sm:$0xff]
    %v124 = vld [vmem:[#allocation6 + $0x280] sm:$0xff]
    %v125 = vld [vmem:[#allocation6 + $0x288] sm:$0xff]
    %v126 = vld [vmem:[#allocation6 + $0x290] sm:$0xff]
    %v127 = vld [vmem:[#allocation6 + $0x298] sm:$0xff]
    %v128 = vld [vmem:[#allocation6 + $0x2a0] sm:$0xff]
    %v129 = vld [vmem:[#allocation6 + $0x2a8] sm:$0xff]
    %v130 = vld [vmem:[#allocation6 + $0x2b0] sm:$0xff]
    %v131 = vld [vmem:[#allocation6 + $0x2b8] sm:$0xff]
    %v132 = vld [vmem:[#allocation6 + $0x2c0] sm:$0xff]
    %v133 = vld [vmem:[#allocation6 + $0x2c8] sm:$0xff]
    %v134 = vld [vmem:[#allocation6 + $0x2d0] sm:$0xff]
    %v135 = vld [vmem:[#allocation6 + $0x2d8] sm:$0xff]
    %v136 = vld [vmem:[#allocation6 + $0x2e0] sm:$0xff]
    %v137 = vld [vmem:[#allocation6 + $0x2e8] sm:$0xff]
    %v138 = vld [vmem:[#allocation6 + $0x2f0] sm:$0xff]
    %v139 = vld [vmem:[#allocation6 + $0x2f8] sm:$0xff]
    %v140 = vld [vmem:[#allocation6 + $0x300] sm:$0xff]
    %v141 = vld [vmem:[#allocation6 + $0x308] sm:$0xff]
    %v142 = vld [vmem:[#allocation6 + $0x310] sm:$0xff]
    %v143 = vld [vmem:[#allocation6 + $0x318] sm:$0xff]
    %v144 = vld [vmem:[#allocation6 + $0x320] sm:$0xff]
    %v145 = vld [vmem:[#allocation6 + $0x328] sm:$0xff]
    %v146 = vld [vmem:[#allocation6 + $0x330] sm:$0xff]
    %v147 = vld [vmem:[#allocation6 + $0x338] sm:$0xff]
    %v148 = vld [vmem:[#allocation6 + $0x340] sm:$0xff]
    %v149 = vld [vmem:[#allocation6 + $0x348] sm:$0xff]
    %v150 = vld [vmem:[#allocation6 + $0x350] sm:$0xff]
    %v151 = vld [vmem:[#allocation6 + $0x358] sm:$0xff]
    %v152 = vld [vmem:[#allocation6 + $0x360] sm:$0xff]
    %v153 = vld [vmem:[#allocation6 + $0x368] sm:$0xff]
    %v154 = vld [vmem:[#allocation6 + $0x370] sm:$0xff]
    %v155 = vld [vmem:[#allocation6 + $0x378] sm:$0xff]
    %v156 = vld [vmem:[#allocation6 + $0x380] sm:$0xff]
    %v157 = vld [vmem:[#allocation6 + $0x388] sm:$0xff]
    %v158 = vld [vmem:[#allocation6 + $0x390] sm:$0xff]
    %v159 = vld [vmem:[#allocation6 + $0x398] sm:$0xff]
    %v160 = vld [vmem:[#allocation6 + $0x3a0] sm:$0xff]
    %v161 = vld [vmem:[#allocation6 + $0x3a8] sm:$0xff]
    %v162 = vld [vmem:[#allocation6 + $0x3b0] sm:$0xff]
    %v163 = vld [vmem:[#allocation6 + $0x3b8] sm:$0xff]
    %v164 = vld [vmem:[#allocation6 + $0x3c0] sm:$0xff]
    %v165 = vld [vmem:[#allocation6 + $0x3c8] sm:$0xff]
    %v166 = vld [vmem:[#allocation6 + $0x3d0] sm:$0xff]
    %v167 = vld [vmem:[#allocation6 + $0x3d8] sm:$0xff]
    %v168 = vld [vmem:[#allocation6 + $0x3e0] sm:$0xff]
    %v169 = vld [vmem:[#allocation6 + $0x3e8] sm:$0xff]
    %v170 = vld [vmem:[#allocation6 + $0x3f0] sm:$0xff]
    %v171 = vld [vmem:[#allocation6 + $0x3f8] sm:$0xff]
    %v172 = vld [vmem:[#allocation6 + $0x400] sm:$0xff]
    %v173 = vld [vmem:[#allocation6 + $0x408] sm:$0xff]
    %v174 = vld [vmem:[#allocation6 + $0x410] sm:$0xff]
    %v175 = vld [vmem:[#allocation6 + $0x418] sm:$0xff]
    %v176 = vld [vmem:[#allocation6 + $0x420] sm:$0xff]
    %v177 = vld [vmem:[#allocation6 + $0x428] sm:$0xff]
    %v178 = vld [vmem:[#allocation6 + $0x430] sm:$0xff]
    %v179 = vld [vmem:[#allocation6 + $0x438] sm:$0xff]
    %v180 = vld [vmem:[#allocation6 + $0x440] sm:$0xff]
    %v181 = vld [vmem:[#allocation6 + $0x448] sm:$0xff]
    %v182 = vld [vmem:[#allocation6 + $0x450] sm:$0xff]
    %v183 = vld [vmem:[#allocation6 + $0x458] sm:$0xff]
    %v184 = vld [vmem:[#allocation6 + $0x460] sm:$0xff]
    %v185 = vld [vmem:[#allocation6 + $0x468] sm:$0xff]
    %v186 = vld [vmem:[#allocation6 + $0x470] sm:$0xff]
    %v187 = vld [vmem:[#allocation6 + $0x478] sm:$0xff]
    %v188 = vld [vmem:[#allocation6 + $0x480] sm:$0xff]
    %v189 = vld [vmem:[#allocation6 + $0x488] sm:$0xff]
    %v190 = vld [vmem:[#allocation6 + $0x490] sm:$0xff]
    %v191 = vld [vmem:[#allocation6 + $0x498] sm:$0xff]
    %v192 = vld [vmem:[#allocation6 + $0x4a0] sm:$0xff]
    %v193 = vld [vmem:[#allocation6 + $0x4a8] sm:$0xff]
    %v194 = vld [vmem:[#allocation6 + $0x4b0] sm:$0xff]
    %v195 = vld [vmem:[#allocation6 + $0x4b8] sm:$0xff]
    %v196 = vld [vmem:[#allocation6 + $0x4c0] sm:$0xff]
    %v197 = vld [vmem:[#allocation6 + $0x4c8] sm:$0xff]
    %v198 = vld [vmem:[#allocation6 + $0x4d0] sm:$0xff]
    %v199 = vld [vmem:[#allocation6 + $0x4d8] sm:$0xff]
    %v200 = vld [vmem:[#allocation6 + $0x4e0] sm:$0xff]
    %v201 = vld [vmem:[#allocation6 + $0x4e8] sm:$0xff]
    %v202 = vld [vmem:[#allocation6 + $0x4f0] sm:$0xff]
    %v203 = vld [vmem:[#allocation6 + $0x4f8] sm:$0xff]
    %v204 = vld [vmem:[#allocation6 + $0x500] sm:$0xff]
    %v205 = vld [vmem:[#allocation6 + $0x508] sm:$0xff]
    %v206 = vld [vmem:[#allocation6 + $0x510] sm:$0xff]
    %v207 = vld [vmem:[#allocation6 + $0x518] sm:$0xff]
    %v208 = vld [vmem:[#allocation6 + $0x520] sm:$0xff]
    %v209 = vld [vmem:[#allocation6 + $0x528] sm:$0xff]
    %v210 = vld [vmem:[#allocation6 + $0x530] sm:$0xff]
    %v211 = vld [vmem:[#allocation6 + $0x538] sm:$0xff]
    %v212 = vld [vmem:[#allocation6 + $0x540] sm:$0xff]
    %v213 = vld [vmem:[#allocation6 + $0x548] sm:$0xff]
    %v214 = vld [vmem:[#allocation6 + $0x550] sm:$0xff]
    %v215 = vld [vmem:[#allocation6 + $0x558] sm:$0xff]
    %v216 = vld [vmem:[#allocation6 + $0x560] sm:$0xff]
    %v217 = vld [vmem:[#allocation6 + $0x568] sm:$0xff]
    %v218 = vld [vmem:[#allocation6 + $0x570] sm:$0xff]
    %v219 = vld [vmem:[#allocation6 + $0x578] sm:$0xff]
    %v220 = vld [vmem:[#allocation6 + $0x580] sm:$0xff]
    %v221 = vld [vmem:[#allocation6 + $0x588] sm:$0xff]
    %v222 = vld [vmem:[#allocation6 + $0x590] sm:$0xff]
    %v223 = vld [vmem:[#allocation6 + $0x598] sm:$0xff]
    %v224 = vld [vmem:[#allocation6 + $0x5a0] sm:$0xff]
    %v225 = vld [vmem:[#allocation6 + $0x5a8] sm:$0xff]
    %v226 = vld [vmem:[#allocation6 + $0x5b0] sm:$0xff]
    %v227 = vld [vmem:[#allocation6 + $0x5b8] sm:$0xff]
    %v228 = vld [vmem:[#allocation6 + $0x5c0] sm:$0xff]
    %v229 = vld [vmem:[#allocation6 + $0x5c8] sm:$0xff]
    %v230 = vld [vmem:[#allocation6 + $0x5d0] sm:$0xff]
    %v231 = vld [vmem:[#allocation6 + $0x5d8] sm:$0xff]
    %v232 = vld [vmem:[#allocation6 + $0x5e0] sm:$0xff]
    %v233 = vld [vmem:[#allocation6 + $0x5e8] sm:$0xff]
    %v234 = vld [vmem:[#allocation6 + $0x5f0] sm:$0xff]
    %v235 = vld [vmem:[#allocation6 + $0x5f8] sm:$0xff]
    %s236 = sld [smem:[#allocation2]]
    %v237 = vstv %s236
    %v240 = vlaneseq
    %v241 = vshrl.u32 %v240, 7
    %v242 = vsub.s32 0, %v241
    %v243 = vrot.slane %v42, %v242
    %v244 = vlaneseq
    %v245 = vshrl.u32 %v244, 7
    %v246 = vsub.s32 1, %v245
    %v247 = vrot.slane %v42, %v246
    %v248 = vlaneseq
    %v249 = vshrl.u32 %v248, 7
    %v250 = vsub.s32 2, %v249
    %v251 = vrot.slane %v42, %v250
    %v252 = vlaneseq
    %v253 = vshrl.u32 %v252, 7
    %v254 = vsub.s32 3, %v253
    %v255 = vrot.slane %v42, %v254
    %v256 = vlaneseq
    %v257 = vshrl.u32 %v256, 7
    %v258 = vsub.s32 4, %v257
    %v259 = vrot.slane %v42, %v258
    %v260 = vlaneseq
    %v261 = vshrl.u32 %v260, 7
    %v262 = vsub.s32 5, %v261
    %v263 = vrot.slane %v42, %v262
    %v264 = vlaneseq
    %v265 = vshrl.u32 %v264, 7
    %v266 = vsub.s32 6, %v265
    %v267 = vrot.slane %v42, %v266
    %v268 = vlaneseq
    %v269 = vshrl.u32 %v268, 7
    %v270 = vsub.s32 7, %v269
    %v271 = vrot.slane %v42, %v270
    %v272 = vlaneseq
    %v273 = vshrl.u32 %v272, 7
    %v274 = vsub.s32 0, %v273
    %v275 = vrot.slane %v43, %v274
    %v276 = vlaneseq
    %v277 = vshrl.u32 %v276, 7
    %v278 = vsub.s32 1, %v277
    %v279 = vrot.slane %v43, %v278
    %v280 = vlaneseq
    %v281 = vshrl.u32 %v280, 7
    %v282 = vsub.s32 2, %v281
    %v283 = vrot.slane %v43, %v282
    %v284 = vlaneseq
    %v285 = vshrl.u32 %v284, 7
    %v286 = vsub.s32 3, %v285
    %v287 = vrot.slane %v43, %v286
    %300 = vmatprep.subr.mxu0 0.0
    %301 = vmatpush1.msra.mxu0 %v59
    %302 = vmatprep.subr.mxu0 0.0
    %303 = vmatpush1.msra.mxu0 %v58
    %304 = vmatprep.subr.mxu0 0.0
    %305 = vmatpush1.msra.mxu0 %v57
    %306 = vmatprep.subr.mxu0 0.0
    %307 = vmatpush1.msra.mxu0 %v56
    %308 = vmatprep.subr.mxu0 0.0
    %309 = vmatpush1.msra.mxu0 %v55
    %310 = vmatprep.subr.mxu0 0.0
    %311 = vmatpush1.msra.mxu0 %v54
    %312 = vmatprep.subr.mxu0 0.0
    %313 = vmatpush1.msra.mxu0 %v53
    %314 = vmatprep.subr.mxu0 0.0
    %315 = vmatpush1.msra.mxu0 %v52
    %316 = vmatprep.subr.mxu0 0.0
    %317 = vmatpush1.msra.mxu0 %v51
    %318 = vmatprep.subr.mxu0 0.0
    %319 = vmatpush1.msra.mxu0 %v50
    %320 = vmatprep.subr.mxu0 0.0
    %321 = vmatpush1.msra.mxu0 %v49
    %322 = vmatprep.subr.mxu0 0.0
    %323 = vmatpush1.msra.mxu0 %v48
    %324 = vmatprep.subr.mxu0 0.0
    %325 = vmatpush1.msra.mxu0 %v47
    %326 = vmatprep.subr.mxu0 0.0
    %327 = vmatpush1.msra.mxu0 %v46
    %328 = vmatprep.subr.mxu0 0.0
    %329 = vmatpush1.msra.mxu0 %v45
    %330 = vmatprep.subr.mxu0 0.0
    %331 = vmatpush1.msra.mxu0 %v44
    %332 = vmatprep.subr.mxu0 0.0
    %333 = vmatpush2.msra.mxu0 %v75
    %334 = vmatprep.subr.mxu0 0.0
    %335 = vmatpush2.msra.mxu0 %v74
    %336 = vmatprep.subr.mxu0 0.0
    %337 = vmatpush2.msra.mxu0 %v73
    %338 = vmatprep.subr.mxu0 0.0
    %339 = vmatpush2.msra.mxu0 %v72
    %340 = vmatprep.subr.mxu0 0.0
    %341 = vmatpush2.msra.mxu0 %v71
    %342 = vmatprep.subr.mxu0 0.0
    %343 = vmatpush2.msra.mxu0 %v70
    %344 = vmatprep.subr.mxu0 0.0
    %345 = vmatpush2.msra.mxu0 %v69
    %346 = vmatprep.subr.mxu0 0.0
    %347 = vmatpush2.msra.mxu0 %v68
    %348 = vmatprep.subr.mxu0 0.0
    %349 = vmatpush2.msra.mxu0 %v67
    %350 = vmatprep.subr.mxu0 0.0
    %351 = vmatpush2.msra.mxu0 %v66
    %352 = vmatprep.subr.mxu0 0.0
    %353 = vmatpush2.msra.mxu0 %v65
    %354 = vmatprep.subr.mxu0 0.0
    %355 = vmatpush2.msra.mxu0 %v64
    %356 = vmatprep.subr.mxu0 0.0
    %357 = vmatpush2.msra.mxu0 %v63
    %358 = vmatprep.subr.mxu0 0.0
    %359 = vmatpush2.msra.mxu0 %v62
    %360 = vmatprep.subr.mxu0 0.0
    %361 = vmatpush2.msra.mxu0 %v61
    %362 = vmatprep.subr.mxu0 0.0
    %363 = vmatpush2.msra.mxu0 %v60
    %364 = vmatprep.mubr.f32.mxu0 %v247
    %365 = vmatmul.mubr.f32.gmra.mxu0 %v243
    %v366 = vpop.f32.mrf.mxu0
    %v367 = vadd.f32 %v237, %v366
    %v368 = vpop.f32.mrf.mxu0
    %369 = vdwg.mxu0
    %370 = vmatprep.subr.mxu0 0.0
    %371 = vmatpush1.msra.mxu0 %v91
    %372 = vmatprep.subr.mxu0 0.0
    %373 = vmatpush1.msra.mxu0 %v90
    %374 = vmatprep.subr.mxu0 0.0
    %375 = vmatpush1.msra.mxu0 %v89
    %376 = vmatprep.subr.mxu0 0.0
    %377 = vmatpush1.msra.mxu0 %v88
    %378 = vmatprep.subr.mxu0 0.0
    %379 = vmatpush1.msra.mxu0 %v87
    %380 = vmatprep.subr.mxu0 0.0
    %381 = vmatpush1.msra.mxu0 %v86
    %382 = vmatprep.subr.mxu0 0.0
    %383 = vmatpush1.msra.mxu0 %v85
    %384 = vmatprep.subr.mxu0 0.0
    %385 = vmatpush1.msra.mxu0 %v84
    %386 = vmatprep.subr.mxu0 0.0
    %387 = vmatpush1.msra.mxu0 %v83
    %388 = vmatprep.subr.mxu0 0.0
    %389 = vmatpush1.msra.mxu0 %v82
    %390 = vmatprep.subr.mxu0 0.0
    %391 = vmatpush1.msra.mxu0 %v81
    %392 = vmatprep.subr.mxu0 0.0
    %393 = vmatpush1.msra.mxu0 %v80
    %394 = vmatprep.subr.mxu0 0.0
    %395 = vmatpush1.msra.mxu0 %v79
    %396 = vmatprep.subr.mxu0 0.0
    %397 = vmatpush1.msra.mxu0 %v78
    %398 = vmatprep.subr.mxu0 0.0
    %399 = vmatpush1.msra.mxu0 %v77
    %400 = vmatprep.subr.mxu0 0.0
    %401 = vmatpush1.msra.mxu0 %v76
    %402 = vmatprep.subr.mxu0 0.0
    %403 = vmatpush2.msra.mxu0 %v107
    %404 = vmatprep.subr.mxu0 0.0
    %405 = vmatpush2.msra.mxu0 %v106
    %406 = vmatprep.subr.mxu0 0.0
    %407 = vmatpush2.msra.mxu0 %v105
    %408 = vmatprep.subr.mxu0 0.0
    %409 = vmatpush2.msra.mxu0 %v104
    %410 = vmatprep.subr.mxu0 0.0
    %411 = vmatpush2.msra.mxu0 %v103
    %412 = vmatprep.subr.mxu0 0.0
    %413 = vmatpush2.msra.mxu0 %v102
    %414 = vmatprep.subr.mxu0 0.0
    %415 = vmatpush2.msra.mxu0 %v101
    %416 = vmatprep.subr.mxu0 0.0
    %417 = vmatpush2.msra.mxu0 %v100
    %418 = vmatprep.subr.mxu0 0.0
    %419 = vmatpush2.msra.mxu0 %v99
    %420 = vmatprep.subr.mxu0 0.0
    %421 = vmatpush2.msra.mxu0 %v98
    %422 = vmatprep.subr.mxu0 0.0
    %423 = vmatpush2.msra.mxu0 %v97
    %424 = vmatprep.subr.mxu0 0.0
    %425 = vmatpush2.msra.mxu0 %v96
    %426 = vmatprep.subr.mxu0 0.0
    %427 = vmatpush2.msra.mxu0 %v95
    %428 = vmatprep.subr.mxu0 0.0
    %429 = vmatpush2.msra.mxu0 %v94
    %430 = vmatprep.subr.mxu0 0.0
    %431 = vmatpush2.msra.mxu0 %v93
    %432 = vmatprep.subr.mxu0 0.0
    %433 = vmatpush2.msra.mxu0 %v92
    %434 = vmatprep.mubr.f32.mxu0 %v255
    %435 = vmatmul.mubr.f32.gmra.mxu0 %v251
    %v436 = vpop.f32.mrf.mxu0
    %v437 = vadd.f32 %v367, %v436
    %v438 = vpop.f32.mrf.mxu0
    %439 = vdwg.mxu0
    %440 = vmatprep.subr.mxu0 0.0
    %441 = vmatpush1.msra.mxu0 %v123
    %442 = vmatprep.subr.mxu0 0.0
    %443 = vmatpush1.msra.mxu0 %v122
    %444 = vmatprep.subr.mxu0 0.0
    %445 = vmatpush1.msra.mxu0 %v121
    %446 = vmatprep.subr.mxu0 0.0
    %447 = vmatpush1.msra.mxu0 %v120
    %448 = vmatprep.subr.mxu0 0.0
    %449 = vmatpush1.msra.mxu0 %v119
    %450 = vmatprep.subr.mxu0 0.0
    %451 = vmatpush1.msra.mxu0 %v118
    %452 = vmatprep.subr.mxu0 0.0
    %453 = vmatpush1.msra.mxu0 %v117
    %454 = vmatprep.subr.mxu0 0.0
    %455 = vmatpush1.msra.mxu0 %v116
    %456 = vmatprep.subr.mxu0 0.0
    %457 = vmatpush1.msra.mxu0 %v115
    %458 = vmatprep.subr.mxu0 0.0
    %459 = vmatpush1.msra.mxu0 %v114
    %460 = vmatprep.subr.mxu0 0.0
    %461 = vmatpush1.msra.mxu0 %v113
    %462 = vmatprep.subr.mxu0 0.0
    %463 = vmatpush1.msra.mxu0 %v112
    %464 = vmatprep.subr.mxu0 0.0
    %465 = vmatpush1.msra.mxu0 %v111
    %466 = vmatprep.subr.mxu0 0.0
    %467 = vmatpush1.msra.mxu0 %v110
    %468 = vmatprep.subr.mxu0 0.0
    %469 = vmatpush1.msra.mxu0 %v109
    %470 = vmatprep.subr.mxu0 0.0
    %471 = vmatpush1.msra.mxu0 %v108
    %472 = vmatprep.subr.mxu0 0.0
    %473 = vmatpush2.msra.mxu0 %v139
    %474 = vmatprep.subr.mxu0 0.0
    %475 = vmatpush2.msra.mxu0 %v138
    %476 = vmatprep.subr.mxu0 0.0
    %477 = vmatpush2.msra.mxu0 %v137
    %478 = vmatprep.subr.mxu0 0.0
    %479 = vmatpush2.msra.mxu0 %v136
    %480 = vmatprep.subr.mxu0 0.0
    %481 = vmatpush2.msra.mxu0 %v135
    %482 = vmatprep.subr.mxu0 0.0
    %483 = vmatpush2.msra.mxu0 %v134
    %484 = vmatprep.subr.mxu0 0.0
    %485 = vmatpush2.msra.mxu0 %v133
    %486 = vmatprep.subr.mxu0 0.0
    %487 = vmatpush2.msra.mxu0 %v132
    %488 = vmatprep.subr.mxu0 0.0
    %489 = vmatpush2.msra.mxu0 %v131
    %490 = vmatprep.subr.mxu0 0.0
    %491 = vmatpush2.msra.mxu0 %v130
    %492 = vmatprep.subr.mxu0 0.0
    %493 = vmatpush2.msra.mxu0 %v129
    %494 = vmatprep.subr.mxu0 0.0
    %495 = vmatpush2.msra.mxu0 %v128
    %496 = vmatprep.subr.mxu0 0.0
    %497 = vmatpush2.msra.mxu0 %v127
    %498 = vmatprep.subr.mxu0 0.0
    %499 = vmatpush2.msra.mxu0 %v126
    %500 = vmatprep.subr.mxu0 0.0
    %501 = vmatpush2.msra.mxu0 %v125
    %502 = vmatprep.subr.mxu0 0.0
    %503 = vmatpush2.msra.mxu0 %v124
    %504 = vmatprep.mubr.f32.mxu0 %v263
    %505 = vmatmul.mubr.f32.gmra.mxu0 %v259
    %v506 = vpop.f32.mrf.mxu0
    %v507 = vadd.f32 %v437, %v506
    %v508 = vpop.f32.mrf.mxu0
    %509 = vdwg.mxu0
    %510 = vmatprep.subr.mxu0 0.0
    %511 = vmatpush1.msra.mxu0 %v155
    %512 = vmatprep.subr.mxu0 0.0
    %513 = vmatpush1.msra.mxu0 %v154
    %514 = vmatprep.subr.mxu0 0.0
    %515 = vmatpush1.msra.mxu0 %v153
    %516 = vmatprep.subr.mxu0 0.0
    %517 = vmatpush1.msra.mxu0 %v152
    %518 = vmatprep.subr.mxu0 0.0
    %519 = vmatpush1.msra.mxu0 %v151
    %520 = vmatprep.subr.mxu0 0.0
    %521 = vmatpush1.msra.mxu0 %v150
    %522 = vmatprep.subr.mxu0 0.0
    %523 = vmatpush1.msra.mxu0 %v149
    %524 = vmatprep.subr.mxu0 0.0
    %525 = vmatpush1.msra.mxu0 %v148
    %526 = vmatprep.subr.mxu0 0.0
    %527 = vmatpush1.msra.mxu0 %v147
    %528 = vmatprep.subr.mxu0 0.0
    %529 = vmatpush1.msra.mxu0 %v146
    %530 = vmatprep.subr.mxu0 0.0
    %531 = vmatpush1.msra.mxu0 %v145
    %532 = vmatprep.subr.mxu0 0.0
    %533 = vmatpush1.msra.mxu0 %v144
    %534 = vmatprep.subr.mxu0 0.0
    %535 = vmatpush1.msra.mxu0 %v143
    %536 = vmatprep.subr.mxu0 0.0
    %537 = vmatpush1.msra.mxu0 %v142
    %538 = vmatprep.subr.mxu0 0.0
    %539 = vmatpush1.msra.mxu0 %v141
    %540 = vmatprep.subr.mxu0 0.0
    %541 = vmatpush1.msra.mxu0 %v140
    %542 = vmatprep.subr.mxu0 0.0
    %543 = vmatpush2.msra.mxu0 %v171
    %544 = vmatprep.subr.mxu0 0.0
    %545 = vmatpush2.msra.mxu0 %v170
    %546 = vmatprep.subr.mxu0 0.0
    %547 = vmatpush2.msra.mxu0 %v169
    %548 = vmatprep.subr.mxu0 0.0
    %549 = vmatpush2.msra.mxu0 %v168
    %550 = vmatprep.subr.mxu0 0.0
    %551 = vmatpush2.msra.mxu0 %v167
    %552 = vmatprep.subr.mxu0 0.0
    %553 = vmatpush2.msra.mxu0 %v166
    %554 = vmatprep.subr.mxu0 0.0
    %555 = vmatpush2.msra.mxu0 %v165
    %556 = vmatprep.subr.mxu0 0.0
    %557 = vmatpush2.msra.mxu0 %v164
    %558 = vmatprep.subr.mxu0 0.0
    %559 = vmatpush2.msra.mxu0 %v163
    %560 = vmatprep.subr.mxu0 0.0
    %561 = vmatpush2.msra.mxu0 %v162
    %562 = vmatprep.subr.mxu0 0.0
    %563 = vmatpush2.msra.mxu0 %v161
    %564 = vmatprep.subr.mxu0 0.0
    %565 = vmatpush2.msra.mxu0 %v160
    %566 = vmatprep.subr.mxu0 0.0
    %567 = vmatpush2.msra.mxu0 %v159
    %568 = vmatprep.subr.mxu0 0.0
    %569 = vmatpush2.msra.mxu0 %v158
    %570 = vmatprep.subr.mxu0 0.0
    %571 = vmatpush2.msra.mxu0 %v157
    %572 = vmatprep.subr.mxu0 0.0
    %573 = vmatpush2.msra.mxu0 %v156
    %574 = vmatprep.mubr.f32.mxu0 %v271
    %575 = vmatmul.mubr.f32.gmra.mxu0 %v267
    %v576 = vpop.f32.mrf.mxu0
    %v577 = vadd.f32 %v507, %v576
    %v578 = vpop.f32.mrf.mxu0
    %579 = vdwg.mxu0
    %580 = vmatprep.subr.mxu0 0.0
    %581 = vmatpush1.msra.mxu0 %v187
    %582 = vmatprep.subr.mxu0 0.0
    %583 = vmatpush1.msra.mxu0 %v186
    %584 = vmatprep.subr.mxu0 0.0
    %585 = vmatpush1.msra.mxu0 %v185
    %586 = vmatprep.subr.mxu0 0.0
    %587 = vmatpush1.msra.mxu0 %v184
    %588 = vmatprep.subr.mxu0 0.0
    %589 = vmatpush1.msra.mxu0 %v183
    %590 = vmatprep.subr.mxu0 0.0
    %591 = vmatpush1.msra.mxu0 %v182
    %592 = vmatprep.subr.mxu0 0.0
    %593 = vmatpush1.msra.mxu0 %v181
    %594 = vmatprep.subr.mxu0 0.0
    %595 = vmatpush1.msra.mxu0 %v180
    %596 = vmatprep.subr.mxu0 0.0
    %597 = vmatpush1.msra.mxu0 %v179
    %598 = vmatprep.subr.mxu0 0.0
    %599 = vmatpush1.msra.mxu0 %v178
    %600 = vmatprep.subr.mxu0 0.0
    %601 = vmatpush1.msra.mxu0 %v177
    %602 = vmatprep.subr.mxu0 0.0
    %603 = vmatpush1.msra.mxu0 %v176
    %604 = vmatprep.subr.mxu0 0.0
    %605 = vmatpush1.msra.mxu0 %v175
    %606 = vmatprep.subr.mxu0 0.0
    %607 = vmatpush1.msra.mxu0 %v174
    %608 = vmatprep.subr.mxu0 0.0
    %609 = vmatpush1.msra.mxu0 %v173
    %610 = vmatprep.subr.mxu0 0.0
    %611 = vmatpush1.msra.mxu0 %v172
    %612 = vmatprep.subr.mxu0 0.0
    %613 = vmatpush2.msra.mxu0 %v203
    %614 = vmatprep.subr.mxu0 0.0
    %615 = vmatpush2.msra.mxu0 %v202
    %616 = vmatprep.subr.mxu0 0.0
    %617 = vmatpush2.msra.mxu0 %v201
    %618 = vmatprep.subr.mxu0 0.0
    %619 = vmatpush2.msra.mxu0 %v200
    %620 = vmatprep.subr.mxu0 0.0
    %621 = vmatpush2.msra.mxu0 %v199
    %622 = vmatprep.subr.mxu0 0.0
    %623 = vmatpush2.msra.mxu0 %v198
    %624 = vmatprep.subr.mxu0 0.0
    %625 = vmatpush2.msra.mxu0 %v197
    %626 = vmatprep.subr.mxu0 0.0
    %627 = vmatpush2.msra.mxu0 %v196
    %628 = vmatprep.subr.mxu0 0.0
    %629 = vmatpush2.msra.mxu0 %v195
    %630 = vmatprep.subr.mxu0 0.0
    %631 = vmatpush2.msra.mxu0 %v194
    %632 = vmatprep.subr.mxu0 0.0
    %633 = vmatpush2.msra.mxu0 %v193
    %634 = vmatprep.subr.mxu0 0.0
    %635 = vmatpush2.msra.mxu0 %v192
    %636 = vmatprep.subr.mxu0 0.0
    %637 = vmatpush2.msra.mxu0 %v191
    %638 = vmatprep.subr.mxu0 0.0
    %639 = vmatpush2.msra.mxu0 %v190
    %640 = vmatprep.subr.mxu0 0.0
    %641 = vmatpush2.msra.mxu0 %v189
    %642 = vmatprep.subr.mxu0 0.0
    %643 = vmatpush2.msra.mxu0 %v188
    %644 = vmatprep.mubr.f32.mxu0 %v279
    %645 = vmatmul.mubr.f32.gmra.mxu0 %v275
    %v646 = vpop.f32.mrf.mxu0
    %v647 = vadd.f32 %v577, %v646
    %v648 = vpop.f32.mrf.mxu0
    %649 = vdwg.mxu0
    %650 = vmatprep.subr.mxu0 0.0
    %651 = vmatpush1.msra.mxu0 %v219
    %652 = vmatprep.subr.mxu0 0.0
    %653 = vmatpush1.msra.mxu0 %v218
    %654 = vmatprep.subr.mxu0 0.0
    %655 = vmatpush1.msra.mxu0 %v217
    %656 = vmatprep.subr.mxu0 0.0
    %657 = vmatpush1.msra.mxu0 %v216
    %658 = vmatprep.subr.mxu0 0.0
    %659 = vmatpush1.msra.mxu0 %v215
    %660 = vmatprep.subr.mxu0 0.0
    %661 = vmatpush1.msra.mxu0 %v214
    %662 = vmatprep.subr.mxu0 0.0
    %663 = vmatpush1.msra.mxu0 %v213
    %664 = vmatprep.subr.mxu0 0.0
    %665 = vmatpush1.msra.mxu0 %v212
    %666 = vmatprep.subr.mxu0 0.0
    %667 = vmatpush1.msra.mxu0 %v211
    %668 = vmatprep.subr.mxu0 0.0
    %669 = vmatpush1.msra.mxu0 %v210
    %670 = vmatprep.subr.mxu0 0.0
    %671 = vmatpush1.msra.mxu0 %v209
    %672 = vmatprep.subr.mxu0 0.0
    %673 = vmatpush1.msra.mxu0 %v208
    %674 = vmatprep.subr.mxu0 0.0
    %675 = vmatpush1.msra.mxu0 %v207
    %676 = vmatprep.subr.mxu0 0.0
    %677 = vmatpush1.msra.mxu0 %v206
    %678 = vmatprep.subr.mxu0 0.0
    %679 = vmatpush1.msra.mxu0 %v205
    %680 = vmatprep.subr.mxu0 0.0
    %681 = vmatpush1.msra.mxu0 %v204
    %682 = vmatprep.subr.mxu0 0.0
    %683 = vmatpush2.msra.mxu0 %v235
    %684 = vmatprep.subr.mxu0 0.0
    %685 = vmatpush2.msra.mxu0 %v234
    %686 = vmatprep.subr.mxu0 0.0
    %687 = vmatpush2.msra.mxu0 %v233
    %688 = vmatprep.subr.mxu0 0.0
    %689 = vmatpush2.msra.mxu0 %v232
    %690 = vmatprep.subr.mxu0 0.0
    %691 = vmatpush2.msra.mxu0 %v231
    %692 = vmatprep.subr.mxu0 0.0
    %693 = vmatpush2.msra.mxu0 %v230
    %694 = vmatprep.subr.mxu0 0.0
    %695 = vmatpush2.msra.mxu0 %v229
    %696 = vmatprep.subr.mxu0 0.0
    %697 = vmatpush2.msra.mxu0 %v228
    %698 = vmatprep.subr.mxu0 0.0
    %699 = vmatpush2.msra.mxu0 %v227
    %700 = vmatprep.subr.mxu0 0.0
    %701 = vmatpush2.msra.mxu0 %v226
    %702 = vmatprep.subr.mxu0 0.0
    %703 = vmatpush2.msra.mxu0 %v225
    %704 = vmatprep.subr.mxu0 0.0
    %705 = vmatpush2.msra.mxu0 %v224
    %706 = vmatprep.subr.mxu0 0.0
    %707 = vmatpush2.msra.mxu0 %v223
    %708 = vmatprep.subr.mxu0 0.0
    %709 = vmatpush2.msra.mxu0 %v222
    %710 = vmatprep.subr.mxu0 0.0
    %711 = vmatpush2.msra.mxu0 %v221
    %712 = vmatprep.subr.mxu0 0.0
    %713 = vmatpush2.msra.mxu0 %v220
    %714 = vmatprep.mubr.f32.mxu0 %v287
    %715 = vmatmul.mubr.f32.gmra.mxu0 %v283
    %v716 = vpop.f32.mrf.mxu0
    %v717 = vadd.f32 %v647, %v716
    %v718 = vpop.f32.mrf.mxu0
    %719 = vdwg.mxu0
    %v720 = vmax.f32 %v717, 0.0
    %721 = vst [vmem:[#allocation8] sm:$0x1] %v720
    // Predicated region
    $region22: #{tpu_custom_call.1} parent=1 // pred_check
      _
    $region23: #{tpu_custom_call.1} parent=1 // pred_check_branch
      %723 = sbr.rel (0) target = $region25
    $region24: #{tpu_custom_call.1} parent=1 // pred_region
      %s725 = ssub.s32 16, 16
      %726 = vsyncadd [#allocation5], %s725
      %s728 = sshll.u32 [#allocation8], 4
      %s729 = int_to_ptr.vmem [resolvable:$true] %s728
      %731 = dma.vmem_to_hbm [thread:$0]  %s729, 16, %s3, [#allocation5]
    $region25: #{tpu_custom_call.1} parent=1 // pred_fallthru
      _
    // Predicated region
    $region26: #{tpu_custom_call.1} parent=1 // pred_check
      _
    $region27: #{tpu_custom_call.1} parent=1 // pred_check_branch
      %733 = sbr.rel (0) target = $region29
    $region28: #{tpu_custom_call.1} parent=1 // pred_region
      %734 = dma.done [#allocation5], 16
    $region29: #{tpu_custom_call.1} parent=1 // pred_fallthru
      _
    %735 = vsyncpa [#allocation4], 1
    %736 = vsyncpa [#allocation7], 1
    %737 = vsyncpa [#allocation5], 1

</llo_original>
